<compile_context>
chip_gen: v5e
topology: v5e:2x2
jax: 0.10.0
libtpu: 0.0.40
codegen_flags: <defaults>
</compile_context>

<pallas_src>
import math
from functools import partial

import jax
import jax.numpy as jnp
from jax.experimental import pallas as pl
from jax.experimental.pallas import tpu as pltpu

_BN_EPS = 1e-5
_LANE = 128
_SUBLANE = 8


def _round_up(v, m):
    return (v + m - 1) // m * m


def _vmem_capacity_bytes():
    """Per-generation VMEM capacity (v5e/v6e 128 MiB, v7x 64 MiB), with fallback."""
    try:
        info = pltpu.get_tpu_info()
        cap = getattr(info, "vmem_capacity_bytes", None)
        if cap:
            return int(cap)
    except Exception:
        pass
    return 64 * 1024 * 1024  # conservative default (v7x per-TC)


def _tile_candidates(dim_p, max_tile):
    """Multiples of 128 that evenly divide dim_p, descending, capped at max_tile."""
    start = min(dim_p, max_tile)
    cands = [t for t in range(start, 0, -_LANE)
             if t % _LANE == 0 and dim_p % t == 0]
    return cands if cands else [dim_p]


def _pick_tiles(n_pad, din_p, dout_p, budget_bytes, max_tile):
    """Pick (tk, tn) so the double-buffered working set fits the VMEM budget."""
    tk_cands = _tile_candidates(din_p, max_tile)
    tn_cands = _tile_candidates(dout_p, max_tile)

    def footprint(tk, tn):
        dbl = 2  # default double-buffering of pipelined operands
        return 4 * (dbl * (n_pad * tk + tk * tn + _SUBLANE * tn + n_pad * tn)
                    + n_pad * tn)  # + f32 accumulator scratch

    ti, tj = 0, 0
    while footprint(tk_cands[ti], tn_cands[tj]) > budget_bytes:
        if tk_cands[ti] >= tn_cands[tj] and ti + 1 < len(tk_cands):
            ti += 1
        elif tj + 1 < len(tn_cands):
            tj += 1
        elif ti + 1 < len(tk_cands):
            ti += 1
        else:
            break
    return tk_cands[ti], tn_cands[tj]


def _fused_linear_bn_relu_kernel(x_ref, w_ref, p_ref, o_ref, acc_ref, *, n_rows):
    """One (Dout-tile, Din-tile) grid step.

    grid axis 0 ("parallel"):  Dout tiles -> independent BN columns (megacore)
    grid axis 1 ("arbitrary"): Din tiles  -> matmul reduction into VMEM accumulator
    """
    k = pl.program_id(1)

    @pl.when(k == 0)
    def _init():
        acc_ref[...] = jnp.zeros_like(acc_ref)

    acc_ref[...] += jnp.dot(
        x_ref[...], w_ref[...], preferred_element_type=jnp.float32
    )

    @pl.when(k == pl.num_programs(1) - 1)
    def _epilogue():
        z = acc_ref[...]                    # (n_pad, tn) f32
        gamma = p_ref[0:1, :]               # packed params: row 0 = gamma
        beta = p_ref[1:2, :]                #                row 1 = beta

        # Linear bias is omitted: BN subtracts the batch mean, so a per-column
        # constant cancels exactly.  Zero-padded rows therefore give z == 0 and
        # contribute nothing to the sums -> no row mask needed.
        inv_n = jnp.float32(1.0 / n_rows)
        s1 = jnp.sum(z, axis=0, keepdims=True)
        s2 = jnp.sum(z * z, axis=0, keepdims=True)
        mean = s1 * inv_n
        var = jnp.maximum(s2 * inv_n - mean * mean, 0.0)  # clamp cancellation

        # hoisted per-column affine: y = z * scale + shift
        scale = gamma * jax.lax.rsqrt(var + _BN_EPS)      # (1, tn)
        shift = beta - mean * scale                       # (1, tn)
        o_ref[...] = jnp.maximum(z * scale + shift, 0.0).astype(o_ref.dtype)


def init_single_linear_params(key, in_dim, out_dim):
    """Mirror SingleLinear init: xavier_normal_ weight, bias filled with 1.0,
    BatchNorm1d defaults gamma=1, beta=0.  Weight is stored pre-transposed and
    pre-padded; gamma/beta packed into one sublane-aligned tile (one DMA)."""
    std = math.sqrt(2.0 / (in_dim + out_dim))
    w = std * jax.random.normal(key, (out_dim, in_dim), jnp.float32)  # torch layout
    b = jnp.ones((out_dim,), jnp.float32)
    gamma = jnp.ones((out_dim,), jnp.float32)
    beta = jnp.zeros((out_dim,), jnp.float32)

    din_p = _round_up(in_dim, _LANE)
    dout_p = _round_up(out_dim, _LANE)

    w_t_pad = jnp.zeros((din_p, dout_p), jnp.float32)
    w_t_pad = w_t_pad.at[:in_dim, :out_dim].set(w.T)

    packed = jnp.zeros((_SUBLANE, dout_p), jnp.float32)
    packed = packed.at[0, :out_dim].set(gamma)
    packed = packed.at[1, :out_dim].set(beta)

    return {
        "w": w, "b": b, "gamma": gamma, "beta": beta,
        "w_t_pad": w_t_pad, "packed_pad": packed,
        "in_dim": in_dim, "out_dim": out_dim,
    }


def single_linear_forward(params, x, *, max_tile=2048):
    """Fused Linear + BatchNorm1d(training) + ReLU. x: (N, in_dim) float32."""
    n, in_dim = x.shape
    assert in_dim == params["in_dim"]
    assert n >= 2, "BatchNorm1d training stats need a batch of at least 2"
    out_dim = params["out_dim"]
    din_p, dout_p = params["w_t_pad"].shape
    n_pad = _round_up(max(n, _SUBLANE), _SUBLANE)

    # Pad only if the input is not already tile-aligned (avoid extra HBM round trip).
    if n_pad == n and din_p == in_dim:
        x_pad = x
    else:
        x_pad = jnp.zeros((n_pad, din_p), jnp.float32).at[:n, :in_dim].set(x)

    vmem_cap = _vmem_capacity_bytes()
    budget = int(vmem_cap * 0.6)            # headroom for compiler scratch
    tk, tn = _pick_tiles(n_pad, din_p, dout_p, budget, max_tile)
    grid = (dout_p // tn, din_p // tk)      # (Dout tiles, Din tiles)

    cost = pl.CostEstimate(
        flops=2 * n * in_dim * out_dim,
        transcendentals=out_dim,            # rsqrt per output column
        bytes_accessed=4 * (n * in_dim + in_dim * out_dim + n * out_dim),
    )

    kernel = partial(_fused_linear_bn_relu_kernel, n_rows=n)
    out_pad = pl.pallas_call(
        kernel,
        out_shape=jax.ShapeDtypeStruct((n_pad, dout_p), jnp.float32),
        grid_spec=pltpu.PrefetchScalarGridSpec(
            num_scalar_prefetch=0,
            grid=grid,
            in_specs=[
                pl.BlockSpec((n_pad, tk), lambda j, k: (0, k)),      # x
                pl.BlockSpec((tk, tn), lambda j, k: (k, j)),         # W^T (pre-padded)
                pl.BlockSpec((_SUBLANE, tn), lambda j, k: (0, j)),   # gamma/beta
            ],
            out_specs=pl.BlockSpec((n_pad, tn), lambda j, k: (0, j)),
            scratch_shapes=[pltpu.VMEM((n_pad, tn), jnp.float32)],
        ),
        compiler_params=pltpu.CompilerParams(
            dimension_semantics=("parallel", "arbitrary"),
            vmem_limit_bytes=int(vmem_cap * 0.8),
        ),
        cost_estimate=cost,
    )(x_pad, params["w_t_pad"], params["packed_pad"])

    if n_pad == n and dout_p == out_dim:
        return out_pad
    return out_pad[:n, :out_dim]


def _reference_forward(params, x):
    """Pure-JAX reference (two-pass BN, with the Linear bias) for checking."""
    z = x @ params["w"].T + params["b"]
    mean = jnp.mean(z, axis=0, keepdims=True)
    var = jnp.mean((z - mean) ** 2, axis=0, keepdims=True)
    y = params["gamma"] * (z - mean) / jnp.sqrt(var + _BN_EPS) + params["beta"]
    return jnp.maximum(y, 0.0)


if __name__ == "__main__":
    key = jax.random.PRNGKey(0)
    key, kx1, kp1, kx2, kp2 = jax.random.split(key, 5)

    # Small module-consistent shapes (exercises the pad/slice path).
    in_dim, out_dim, batch = 32, 64, 8
    x1 = jax.random.normal(kx1, (batch, in_dim), jnp.float32)
    params1 = init_single_linear_params(kp1, in_dim, out_dim)
    out1 = jax.block_until_ready(single_linear_forward(params1, x1))
    ref1 = _reference_forward(params1, x1)
    assert out1.shape == (batch, out_dim)
    assert jnp.allclose(out1, ref1, atol=1e-4, rtol=1e-4), "mismatch (small shape)"

    # Aligned shapes with forced small tiles to exercise the tiled
    # (Dout-parallel, Din-arbitrary) grid and the VMEM accumulator path.
    in_dim2, out_dim2, batch2 = 384, 256, 16
    x2 = jax.random.normal(kx2, (batch2, in_dim2), jnp.float32)
    params2 = init_single_linear_params(kp2, in_dim2, out_dim2)
    out2 = jax.block_until_ready(single_linear_forward(params2, x2, max_tile=128))
    ref2 = _reference_forward(params2, x2)
    assert out2.shape == (batch2, out_dim2)
    assert jnp.allclose(out2, ref2, atol=1e-4, rtol=1e-4), "mismatch (tiled grid)"

    print("KERNEL_OK")
</pallas_src>

<mosaic_0001>
module attributes {stable_mosaic.version = 11 : i64} {
  func.func @_fused_linear_bn_relu_kernel(%arg0: i32, %arg1: i32, %arg2: memref<8x128xf32, #tpu.memory_space<vmem>>, %arg3: memref<128x128xf32, #tpu.memory_space<vmem>>, %arg4: memref<8x128xf32, #tpu.memory_space<vmem>>, %arg5: memref<8x128xf32, #tpu.memory_space<vmem>>, %arg6: memref<8x128xf32, #tpu.memory_space<vmem>>) attributes {dimension_semantics = [#tpu.dimension_semantics<parallel>, #tpu.dimension_semantics<arbitrary>], iteration_bounds = array<i64: 1, 1>, scalar_prefetch = 0 : i64, scratch_operands = 1 : i64, tpu.core_type = #tpu.core_type<tc>, window_params = [{transform_indices = @transform_0, window_bounds = array<i64: 8, 128>}, {transform_indices = @transform_1, window_bounds = array<i64: 128, 128>}, {transform_indices = @transform_2, window_bounds = array<i64: 8, 128>}, {transform_indices = @transform_3, window_bounds = array<i64: 8, 128>}]} {
    %c0_i32 = arith.constant 0 : i32
    %0 = arith.cmpi eq, %arg1, %c0_i32 : i32
    %1 = arith.extui %0 : i1 to i32
    %c0_i32_0 = arith.constant 0 : i32
    %2 = arith.cmpi ne, %1, %c0_i32_0 : i32
    scf.if %2 {
      %cst_10 = arith.constant 0.000000e+00 : f32
      %12 = vector.broadcast %cst_10 : f32 to vector<8x128xf32>
      %c0_11 = arith.constant 0 : index
      %c0_12 = arith.constant 0 : index
      %13 = vector.load %arg6[%c0_11, %c0_12] : memref<8x128xf32, #tpu.memory_space<vmem>>, vector<8x128xf32>
      tpu.vector_store %arg6[%c0_11, %c0_12], %12 {strides = array<i32>} : memref<8x128xf32, #tpu.memory_space<vmem>>, vector<8x128xf32>,
    } else {
    }
    %c0 = arith.constant 0 : index
    %c0_1 = arith.constant 0 : index
    %3 = vector.load %arg6[%c0, %c0_1] : memref<8x128xf32, #tpu.memory_space<vmem>>, vector<8x128xf32>
    %c0_2 = arith.constant 0 : index
    %c0_3 = arith.constant 0 : index
    %4 = vector.load %arg2[%c0_2, %c0_3] : memref<8x128xf32, #tpu.memory_space<vmem>>, vector<8x128xf32>
    %c0_4 = arith.constant 0 : index
    %c0_5 = arith.constant 0 : index
    %5 = vector.load %arg3[%c0_4, %c0_5] : memref<128x128xf32, #tpu.memory_space<vmem>>, vector<128x128xf32>
    %cst = arith.constant dense<0.000000e+00> : vector<8x128xf32>
    %6 = tpu.matmul %4, %5, %cst {dimension_numbers = #tpu.dot_dimension_numbers<[1], [0], [0], [1], [0, 0, 1, 1], [], []>} : vector<8x128xf32>, vector<128x128xf32>, vector<8x128xf32> -> vector<8x128xf32>
    %7 = arith.addf %3, %6 : vector<8x128xf32>
    %c0_6 = arith.constant 0 : index
    %c0_7 = arith.constant 0 : index
    %8 = vector.load %arg6[%c0_6, %c0_7] : memref<8x128xf32, #tpu.memory_space<vmem>>, vector<8x128xf32>
    tpu.vector_store %arg6[%c0_6, %c0_7], %7 {strides = array<i32>} : memref<8x128xf32, #tpu.memory_space<vmem>>, vector<8x128xf32>,
    %c0_i32_8 = arith.constant 0 : i32
    %9 = arith.cmpi eq, %arg1, %c0_i32_8 : i32
    %10 = arith.extui %9 : i1 to i32
    %c0_i32_9 = arith.constant 0 : i32
    %11 = arith.cmpi ne, %10, %c0_i32_9 : i32
    scf.if %11 {
      %c0_10 = arith.constant 0 : index
      %c0_11 = arith.constant 0 : index
      %12 = vector.load %arg6[%c0_10, %c0_11] : memref<8x128xf32, #tpu.memory_space<vmem>>, vector<8x128xf32>
      %c0_12 = arith.constant 0 : index
      %c0_13 = arith.constant 0 : index
      %13 = vector.load %arg4[%c0_12, %c0_13] : memref<8x128xf32, #tpu.memory_space<vmem>>, vector<1x128xf32>
      %c1 = arith.constant 1 : index
      %c0_14 = arith.constant 0 : index
      %14 = vector.load %arg4[%c1, %c0_14] : memref<8x128xf32, #tpu.memory_space<vmem>>, vector<1x128xf32>
      %cst_15 = arith.constant dense<0.000000e+00> : vector<128xf32>
      %15 = vector.multi_reduction <add>, %12, %cst_15 [0] : vector<8x128xf32> to vector<128xf32>
      %16 = vector.shape_cast %15 : vector<128xf32> to vector<1x128xf32>
      %17 = arith.mulf %12, %12 : vector<8x128xf32>
      %cst_16 = arith.constant dense<0.000000e+00> : vector<128xf32>
      %18 = vector.multi_reduction <add>, %17, %cst_16 [0] : vector<8x128xf32> to vector<128xf32>
      %19 = vector.shape_cast %18 : vector<128xf32> to vector<1x128xf32>
      %cst_17 = arith.constant 1.250000e-01 : f32
      %20 = vector.broadcast %cst_17 : f32 to vector<1x128xf32>
      %21 = arith.mulf %16, %20 : vector<1x128xf32>
      %cst_18 = arith.constant 1.250000e-01 : f32
      %22 = vector.broadcast %cst_18 : f32 to vector<1x128xf32>
      %23 = arith.mulf %19, %22 : vector<1x128xf32>
      %24 = arith.mulf %21, %21 : vector<1x128xf32>
      %25 = arith.subf %23, %24 : vector<1x128xf32>
      %cst_19 = arith.constant 0.000000e+00 : f32
      %26 = vector.broadcast %cst_19 : f32 to vector<1x128xf32>
      %27 = arith.maximumf %25, %26 : vector<1x128xf32>
      %cst_20 = arith.constant 9.99999974E-6 : f32
      %28 = vector.broadcast %cst_20 : f32 to vector<1x128xf32>
      %29 = arith.addf %27, %28 : vector<1x128xf32>
      %30 = math.rsqrt %29 : vector<1x128xf32>
      %31 = arith.mulf %13, %30 : vector<1x128xf32>
      %32 = arith.mulf %21, %31 : vector<1x128xf32>
      %33 = arith.subf %14, %32 : vector<1x128xf32>
      %34 = vector.broadcast %31 : vector<1x128xf32> to vector<8x128xf32>
      %35 = arith.mulf %12, %34 : vector<8x128xf32>
      %36 = vector.broadcast %33 : vector<1x128xf32> to vector<8x128xf32>
      %37 = arith.addf %35, %36 : vector<8x128xf32>
      %cst_21 = arith.constant 0.000000e+00 : f32
      %38 = vector.broadcast %cst_21 : f32 to vector<8x128xf32>
      %39 = arith.maximumf %37, %38 : vector<8x128xf32>
      %c0_22 = arith.constant 0 : index
      %c0_23 = arith.constant 0 : index
      %40 = vector.load %arg5[%c0_22, %c0_23] : memref<8x128xf32, #tpu.memory_space<vmem>>, vector<8x128xf32>
      tpu.vector_store %arg5[%c0_22, %c0_23], %39 {strides = array<i32>} : memref<8x128xf32, #tpu.memory_space<vmem>>, vector<8x128xf32>,
    } else {
    }
    return
  }
  func.func @transform_0(%arg0: i32, %arg1: i32) -> (i32, i32) {
    %c0_i32 = arith.constant 0 : i32
    %c0_i32_0 = arith.constant 0 : i32
    return %c0_i32, %arg1 : i32, i32
  }
  func.func @transform_1(%arg0: i32, %arg1: i32) -> (i32, i32) {
    %c0_i32 = arith.constant 0 : i32
    return %arg1, %arg0 : i32, i32
  }
  func.func @transform_2(%arg0: i32, %arg1: i32) -> (i32, i32) {
    %c0_i32 = arith.constant 0 : i32
    %c0_i32_0 = arith.constant 0 : i32
    return %c0_i32, %arg0 : i32, i32
  }
  func.func @transform_3(%arg0: i32, %arg1: i32) -> (i32, i32) {
    %c0_i32 = arith.constant 0 : i32
    %c0_i32_0 = arith.constant 0 : i32
    return %c0_i32, %arg0 : i32, i32
  }
}

</mosaic_0001>

<llo_original>
// kernel: tpu_custom_call.1
$region0: #{tpu_custom_call.1}
  #allocation0 [shape = 'u32[]', space=smem, size = 0x4, offset = 0x4, fixed_abs, tag = 'smem constant byte address 0x4 - core index']
  #allocation1 [shape = 'u32[72,128]{1,0:T(1,128)}', space=vmem, size = 0x9000, scoped, tag = 'internal scratch']
  #allocation2 [shape = 'f32[8,128]{1,0:T(8,128)}', space=vmem, size = 0x1000, scoped, tag = 'scratch operand']
  %s0 = inlined_call_operand.hbm [shape: f32[8,128], index: 0, kind: input, shape index: {}]
  %s1 = inlined_call_operand.hbm [shape: f32[128,128], index: 1, kind: input, shape index: {}]
  %s2 = inlined_call_operand.hbm [shape: f32[8,128], index: 2, kind: input, shape index: {}]
  %s3 = inlined_call_operand.hbm [shape: f32[8,128], index: 3, kind: output, shape index: {}]
  %s4 = sld [smem:[#allocation0]]
  $region42: #{tpu_custom_call.1} parent=0
    _
  %s6 = ssub.s32 1, %s4
  %s7 = scalar_select 0, %s6, %s4
  $region1: #{tpu_custom_call.1} parent=0
    #allocation3 [shape = 'u8[4096]{0}', space=vmem, size = 0x1000, scoped, tag = 'input window, operand 0, single buffered']
    #allocation4 [shape = 's32[1]{0}', space=sflag, size = 0x4, scoped, tag = 'scoped memory for tpu_custom_call.1']
    #allocation5 [shape = 's32[1]{0}', space=sflag, size = 0x4, scoped, tag = 'scoped memory for tpu_custom_call.1']
    #allocation6 [shape = 'u8[65536]{0}', space=vmem, size = 0x10000, scoped, tag = 'input window, operand 1, single buffered']
    #allocation7 [shape = 's32[1]{0}', space=sflag, size = 0x4, scoped, tag = 'scoped memory for tpu_custom_call.1']
    #allocation8 [shape = 'u8[4096]{0}', space=vmem, size = 0x1000, scoped, tag = 'input window, operand 2, single buffered']
    #allocation9 [shape = 'u8[4096]{0}', space=vmem, size = 0x1000, scoped, tag = 'output window, operand 0, single buffered']
    %8 = vsyncpa [#allocation4], 0
    %9 = vsyncpa [#allocation7], 0
    %10 = vsyncpa [#allocation5], 0
    // Predicated region
    $region2: #{tpu_custom_call.1} parent=1 // pred_check
      _
    $region3: #{tpu_custom_call.1} parent=1 // pred_check_branch
      %12 = sbr.rel (0) target = $region5
    $region4: #{tpu_custom_call.1} parent=1 // pred_region
      %14 = vsyncadd [#allocation4], 0
      %s16 = sshll.u32 %s0, 4
      %s17 = int_to_ptr.hbm [resolvable:$true] %s16
      %s18 = sshll.u32 [#allocation3], 4
      %s19 = int_to_ptr.vmem [resolvable:$true] %s18
      %21 = dma.hbm_to_vmem [thread:$0]  %s17, 128, %s19, [#allocation4]
    $region5: #{tpu_custom_call.1} parent=1 // pred_fallthru
      _
    // Predicated region
    $region6: #{tpu_custom_call.1} parent=1 // pred_check
      _
    $region7: #{tpu_custom_call.1} parent=1 // pred_check_branch
      %23 = sbr.rel (0) target = $region9
    $region8: #{tpu_custom_call.1} parent=1 // pred_region
      %25 = vsyncadd [#allocation7], 0
      %s26 = sshll.u32 %s1, 4
      %s27 = int_to_ptr.hbm [resolvable:$true] %s26
      %s28 = sshll.u32 [#allocation6], 4
      %s29 = int_to_ptr.vmem [resolvable:$true] %s28
      %34 = dma.hbm_to_vmem [thread:$0]  %s27, 2048, %s29, [#allocation7], 128, 128, 8
    $region9: #{tpu_custom_call.1} parent=1 // pred_fallthru
      _
    // Predicated region
    $region10: #{tpu_custom_call.1} parent=1 // pred_check
      _
    $region11: #{tpu_custom_call.1} parent=1 // pred_check_branch
      %36 = sbr.rel (0) target = $region13
    $region12: #{tpu_custom_call.1} parent=1 // pred_region
      %38 = vsyncadd [#allocation7], 0
      %s40 = sshll.u32 %s2, 4
      %s41 = int_to_ptr.hbm [resolvable:$true] %s40
      %s42 = sshll.u32 [#allocation8], 4
      %s43 = int_to_ptr.vmem [resolvable:$true] %s42
      %45 = dma.hbm_to_vmem [thread:$0]  %s41, 128, %s43, [#allocation7]
    $region13: #{tpu_custom_call.1} parent=1 // pred_fallthru
      _
    // Predicated region
    $region14: #{tpu_custom_call.1} parent=1 // pred_check
      _
    $region15: #{tpu_custom_call.1} parent=1 // pred_check_branch
      %47 = sbr.rel (0) target = $region17
    $region16: #{tpu_custom_call.1} parent=1 // pred_region
      %49 = dma.done [#allocation4], 128
    $region17: #{tpu_custom_call.1} parent=1 // pred_fallthru
      _
    // Predicated region
    $region18: #{tpu_custom_call.1} parent=1 // pred_check
      _
    $region19: #{tpu_custom_call.1} parent=1 // pred_check_branch
      %51 = sbr.rel (0) target = $region21
    $region20: #{tpu_custom_call.1} parent=1 // pred_region
      %53 = dma.done [#allocation7], 2048
    $region21: #{tpu_custom_call.1} parent=1 // pred_fallthru
      _
    // Predicated region
    $region22: #{tpu_custom_call.1} parent=1 // pred_check
      _
    $region23: #{tpu_custom_call.1} parent=1 // pred_check_branch
      %55 = sbr.rel (0) target = $region25
    $region24: #{tpu_custom_call.1} parent=1 // pred_region
      %57 = dma.done [#allocation7], 128
    $region25: #{tpu_custom_call.1} parent=1 // pred_fallthru
      _
    %p58 = scmp.eq.s32.totalorder 0, 0
    // Predicated region
    $region26: #{tpu_custom_call.1} parent=1 // pred_check
      %p59 = pneg %p58
    $region27: #{tpu_custom_call.1} parent=1 // pred_check_branch
      %61 = sbr.rel (%p59) target = $region29
    $region28: #{tpu_custom_call.1} parent=1 // pred_region
      %62 = vst [vmem:[#allocation2] sm:$0xff] 0.0
    $region29: #{tpu_custom_call.1} parent=1 // pred_fallthru
      _
    %v63 = vld [vmem:[#allocation2] sm:$0xff]
    %v64 = vld [vmem:[#allocation3] sm:$0xff]
    %v65 = vld [vmem:[#allocation6] sm:$0xff]
    %v66 = vld [vmem:[#allocation6 + $0x8] sm:$0xff]
    %v67 = vld [vmem:[#allocation6 + $0x10] sm:$0xff]
    %v68 = vld [vmem:[#allocation6 + $0x18] sm:$0xff]
    %v69 = vld [vmem:[#allocation6 + $0x20] sm:$0xff]
    %v70 = vld [vmem:[#allocation6 + $0x28] sm:$0xff]
    %v71 = vld [vmem:[#allocation6 + $0x30] sm:$0xff]
    %v72 = vld [vmem:[#allocation6 + $0x38] sm:$0xff]
    %v73 = vld [vmem:[#allocation6 + $0x40] sm:$0xff]
    %v74 = vld [vmem:[#allocation6 + $0x48] sm:$0xff]
    %v75 = vld [vmem:[#allocation6 + $0x50] sm:$0xff]
    %v76 = vld [vmem:[#allocation6 + $0x58] sm:$0xff]
    %v77 = vld [vmem:[#allocation6 + $0x60] sm:$0xff]
    %v78 = vld [vmem:[#allocation6 + $0x68] sm:$0xff]
    %v79 = vld [vmem:[#allocation6 + $0x70] sm:$0xff]
    %v80 = vld [vmem:[#allocation6 + $0x78] sm:$0xff]
    %81 = vmatpush.msra.mxu0 %v80
    %82 = vmatpush.msra.mxu0 %v79
    %83 = vmatpush.msra.mxu0 %v78
    %84 = vmatpush.msra.mxu0 %v77
    %85 = vmatpush.msra.mxu0 %v76
    %86 = vmatpush.msra.mxu0 %v75
    %87 = vmatpush.msra.mxu0 %v74
    %88 = vmatpush.msra.mxu0 %v73
    %89 = vmatpush.msra.mxu0 %v72
    %90 = vmatpush.msra.mxu0 %v71
    %91 = vmatpush.msra.mxu0 %v70
    %92 = vmatpush.msra.mxu0 %v69
    %93 = vmatpush.msra.mxu0 %v68
    %94 = vmatpush.msra.mxu0 %v67
    %95 = vmatpush.msra.mxu0 %v66
    %96 = vmatpush.msra.mxu0 %v65
    %97 = vmatmul.f32.gmra.mxu0 %v64
    %v98 = vpop.f32.mrf.mxu0
    %v99 = vadd.f32 0.0, %v98
    %100 = vdwg.mxu0
    %v101 = vadd.f32 %v63, %v99
    %102 = vst [vmem:[#allocation2] sm:$0xff] %v101
    // Predicated region
    $region30: #{tpu_custom_call.1} parent=1 // pred_check
      %p103 = pneg %p58
    $region31: #{tpu_custom_call.1} parent=1 // pred_check_branch
      %105 = sbr.rel (%p103) target = $region33
    $region32: #{tpu_custom_call.1} parent=1 // pred_region
      %v106 = vld [vmem:[#allocation2] sm:$0xff]
      %v107 = vld [vmem:[#allocation8] sm:$0x1]
      %v108 = vld [vmem:[#allocation8 + $0x1] sm:$0x1]
      %v109 = vrot.slane %v106, 4
      %v110 = vadd.f32 %v106, %v109
      %v111 = vrot.slane %v110, 2
      %v112 = vadd.f32 %v110, %v111
      %v113 = vrot.slane %v112, 1
      %v114 = vadd.f32 %v112, %v113
      %v115 = vmul.f32 %v106, %v106
      %v116 = vrot.slane %v115, 4
      %v117 = vadd.f32 %v115, %v116
      %v118 = vrot.slane %v117, 2
      %v119 = vadd.f32 %v117, %v118
      %v120 = vrot.slane %v119, 1
      %v121 = vadd.f32 %v119, %v120
      %v122 = vmul.f32 %v114, 0.125
      %v123 = vmul.f32 %v121, 0.125
      %v124 = vmul.f32 %v122, %v122
      %v125 = vsub.f32 %v123, %v124
      %v126 = vmax.f32 %v125, 0.0
      %v127 = vadd.f32 %v126, 1e-05
      %v128 = vrsqrt.pop %v127
      %v129 = vmul.f32 %v128, %v127
      %v130 = vmul.f32 %v129, %v128
      %v131 = vmul.f32 0.5, %v130
      %v132 = vsub.f32 1.5, %v131
      %v133 = vmul.f32 %v128, %v132
      %vm134 = vweird.f32 %v127
      %vm135 = vweird.f32 %v128
      %vm136 = vmor %vm134, %vm135
      %v137 = vsel %vm136, %v128, %v133
      %v138 = vmul.f32 %v107, %v137
      %v139 = vmul.f32 %v122, %v138
      %v140 = vsub.f32 %v108, %v139
      %v141 = vperm.slane %v138, 0
      %v142 = vmul.f32 %v106, %v141
      %v143 = vperm.slane %v140, 0
      %v144 = vadd.f32 %v142, %v143
      %v145 = vmax.f32 %v144, 0.0
      %146 = vst [vmem:[#allocation9] sm:$0xff] %v145
    $region33: #{tpu_custom_call.1} parent=1 // pred_fallthru
      _
    // Predicated region
    $region34: #{tpu_custom_call.1} parent=1 // pred_check
      _
    $region35: #{tpu_custom_call.1} parent=1 // pred_check_branch
      %148 = sbr.rel (0) target = $region37
    $region36: #{tpu_custom_call.1} parent=1 // pred_region
      %150 = vsyncadd [#allocation5], 0
      %s152 = sshll.u32 [#allocation9], 4
      %s153 = int_to_ptr.vmem [resolvable:$true] %s152
      %s154 = sshll.u32 %s3, 4
      %s155 = int_to_ptr.hbm [resolvable:$true] %s154
      %157 = dma.vmem_to_hbm [thread:$0]  %s153, 128, %s155, [#allocation5]
    $region37: #{tpu_custom_call.1} parent=1 // pred_fallthru
      _
    // Predicated region
    $region38: #{tpu_custom_call.1} parent=1 // pred_check
      _
    $region39: #{tpu_custom_call.1} parent=1 // pred_check_branch
      %159 = sbr.rel (0) target = $region41
    $region40: #{tpu_custom_call.1} parent=1 // pred_region
      %161 = dma.done [#allocation5], 128
    $region41: #{tpu_custom_call.1} parent=1 // pred_fallthru
      _
    %162 = vsyncpa [#allocation4], 1
    %163 = vsyncpa [#allocation7], 1
    %164 = vsyncpa [#allocation5], 1

</llo_original>
